<compile_context>
chip_gen: v6e
topology: v6e:2x2x1
jax: 0.10.0
libtpu: 0.0.40
codegen_flags: <defaults>
</compile_context>

<pallas_src>
import jax
import jax.numpy as jnp
from jax.experimental import pallas as pl
from jax.experimental.pallas import tpu as pltpu


def attention_head_kernel(x_ref, w_ref, o_ref):
    """x_ref: (B, S, E); w_ref: (E+1, 3D) = [Wq.T|Wk.T|Wv.T ; bq|bk|bv]; o_ref: (B, S, D)."""
    B, S, E = x_ref.shape
    D = o_ref.shape[-1]

    # Single fused weight+bias operand (one DMA stream).
    w = w_ref[pl.ds(0, E), :]          # (E, 3D)   pre-transposed fused weights
    bias = w_ref[pl.ds(E, 1), :]       # (1, 3D)   fused biases

    # Fused QKV projection: one (B*S, E) @ (E, 3D) MXU matmul, f32 accumulation.
    # The reshapes only merge/split the leading dims (lane dim untouched).
    x2d = x_ref[...].reshape(B * S, E)
    qkv = jnp.dot(x2d, w, preferred_element_type=jnp.float32) + bias   # (B*S, 3D) f32
    qkv = qkv.reshape(B, S, 3 * D)

    q = qkv[:, :, 0 * D:1 * D]
    k = qkv[:, :, 1 * D:2 * D]
    v = qkv[:, :, 2 * D:3 * D]

    # A[b] = Q[b] @ K[b]^T : single batched dot_general, contracting the head
    # dim of both operands (no materialized transpose, no per-batch unroll).
    a = jax.lax.dot_general(
        q, k,
        dimension_numbers=(((2,), (2,)), ((0,), (0,))),
        preferred_element_type=jnp.float32)                            # (B, S, S)

    # Numerically stable softmax with exact normalization, all in f32.
    a_max = jnp.max(a, axis=-1, keepdims=True)
    p = jnp.exp(a - a_max)
    p = p / jnp.sum(p, axis=-1, keepdims=True)

    # H[b] = P[b] @ V[b]
    h = jax.lax.dot_general(
        p, v,
        dimension_numbers=(((2,), (1,)), ((0,), (0,))),
        preferred_element_type=jnp.float32)                            # (B, S, D)

    o_ref[...] = h.astype(o_ref.dtype)


def prepare_params(wq, bq, wk, bk, wv, bv):
    """One-time (init-time) parameter fusion.

    PyTorch Linear weights are (D, E); transpose and fuse along the output dim,
    then append the fused bias as one extra sublane row -> (E+1, 3D).
    """
    w_qkv = jnp.concatenate([wq.T, wk.T, wv.T], axis=1)        # (E, 3D)
    b_qkv = jnp.concatenate([bq, bk, bv])[None, :]             # (1, 3D)
    return jnp.concatenate([w_qkv, b_qkv], axis=0)             # (E+1, 3D)


def attention_head(x, w_aug):
    """x: (B, S, E); w_aug: (E+1, 3*D) as produced by prepare_params."""
    B, S, E = x.shape
    D = w_aug.shape[1] // 3
    return pl.pallas_call(
        attention_head_kernel,
        out_shape=jax.ShapeDtypeStruct((B, S, D), x.dtype),
        # Gridless call: whole arrays resident in VMEM, no pipeline bookkeeping.
        in_specs=[
            pl.BlockSpec(memory_space=pltpu.MemorySpace.VMEM),
            pl.BlockSpec(memory_space=pltpu.MemorySpace.VMEM),
        ],
        out_specs=pl.BlockSpec(memory_space=pltpu.MemorySpace.VMEM),
    )(x, w_aug)


def reference(x, wq, bq, wk, bk, wv, bv):
    hp = jax.lax.Precision.HIGHEST
    q = jnp.einsum("bse,de->bsd", x, wq, precision=hp) + bq
    k = jnp.einsum("bse,de->bsd", x, wk, precision=hp) + bk
    v = jnp.einsum("bse,de->bsd", x, wv, precision=hp) + bv
    a = jnp.einsum("bid,bjd->bij", q, k, precision=hp)
    a = jax.nn.softmax(a, axis=-1)
    return jnp.einsum("bij,bjd->bid", a, v, precision=hp)


if __name__ == "__main__":
    B, S, E, D = 2, 8, 32, 16   # batch, seq, embedding_dim, head_dim

    key = jax.random.PRNGKey(0)
    kx, kq, kbq, kk, kbk, kv, kbv = jax.random.split(key, 7)

    x = jax.random.normal(kx, (B, S, E), dtype=jnp.float32)
    # PyTorch Linear convention: weight (out, in), bias (out,).
    wq = jax.random.normal(kq, (D, E), dtype=jnp.float32) * 0.1
    bq = jax.random.normal(kbq, (D,), dtype=jnp.float32) * 0.1
    wk = jax.random.normal(kk, (D, E), dtype=jnp.float32) * 0.1
    bk = jax.random.normal(kbk, (D,), dtype=jnp.float32) * 0.1
    wv = jax.random.normal(kv, (D, E), dtype=jnp.float32) * 0.1
    bv = jax.random.normal(kbv, (D,), dtype=jnp.float32) * 0.1

    # Init-time parameter fusion (hoisted out of the per-call path).
    w_aug = jax.block_until_ready(prepare_params(wq, bq, wk, bk, wv, bv))

    out = attention_head(x, w_aug)
    out = jax.block_until_ready(out)

    ref = reference(x, wq, bq, wk, bk, wv, bv)
    assert out.shape == (B, S, D)
    assert jnp.allclose(out, ref, atol=1e-4, rtol=1e-4), "mismatch vs reference"

    print("KERNEL_OK")
</pallas_src>

<mosaic_0001>
module attributes {stable_mosaic.version = 11 : i64} {
  func.func @attention_head_kernel(%arg0: memref<2x8x32xf32, #tpu.memory_space<vmem>>, %arg1: memref<33x48xf32, #tpu.memory_space<vmem>>, %arg2: memref<2x8x16xf32, #tpu.memory_space<vmem>>) attributes {dimension_semantics = [], scalar_prefetch = 0 : i64, scratch_operands = 0 : i64, tpu.core_type = #tpu.core_type<tc>} {
    %c0 = arith.constant 0 : index
    %c0_0 = arith.constant 0 : index
    %0 = vector.load %arg1[%c0, %c0_0] : memref<33x48xf32, #tpu.memory_space<vmem>>, vector<32x48xf32>
    %c32 = arith.constant 32 : index
    %c0_1 = arith.constant 0 : index
    %1 = vector.load %arg1[%c32, %c0_1] : memref<33x48xf32, #tpu.memory_space<vmem>>, vector<1x48xf32>
    %c0_2 = arith.constant 0 : index
    %c0_3 = arith.constant 0 : index
    %c0_4 = arith.constant 0 : index
    %2 = vector.load %arg0[%c0_2, %c0_3, %c0_4] : memref<2x8x32xf32, #tpu.memory_space<vmem>>, vector<2x8x32xf32>
    %3 = vector.shape_cast %2 : vector<2x8x32xf32> to vector<16x32xf32>
    %cst = arith.constant dense<0.000000e+00> : vector<16x48xf32>
    %4 = tpu.matmul %3, %0, %cst {dimension_numbers = #tpu.dot_dimension_numbers<[1], [0], [0], [1], [0, 0, 1, 1], [], []>} : vector<16x32xf32>, vector<32x48xf32>, vector<16x48xf32> -> vector<16x48xf32>
    %5 = vector.broadcast %1 : vector<1x48xf32> to vector<16x48xf32>
    %6 = arith.addf %4, %5 : vector<16x48xf32>
    %7 = vector.shape_cast %6 : vector<16x48xf32> to vector<2x8x48xf32>
    %8 = vector.extract_strided_slice %7 {offsets = [0, 0, 0], sizes = [2, 8, 16], strides = [1, 1, 1]} : vector<2x8x48xf32> to vector<2x8x16xf32>
    %9 = vector.extract_strided_slice %7 {offsets = [0, 0, 16], sizes = [2, 8, 16], strides = [1, 1, 1]} : vector<2x8x48xf32> to vector<2x8x16xf32>
    %10 = vector.extract_strided_slice %7 {offsets = [0, 0, 32], sizes = [2, 8, 16], strides = [1, 1, 1]} : vector<2x8x48xf32> to vector<2x8x16xf32>
    %cst_5 = arith.constant dense<0.000000e+00> : vector<2x8x8xf32>
    %11 = tpu.matmul %8, %9, %cst_5 {dimension_numbers = #tpu.dot_dimension_numbers<[2], [2], [1], [1], [0, 0, 0, 1, 1, 1], [0], [0]>} : vector<2x8x16xf32>, vector<2x8x16xf32>, vector<2x8x8xf32> -> vector<2x8x8xf32>
    %cst_6 = arith.constant dense<0xFF800000> : vector<2x8xf32>
    %12 = vector.multi_reduction <maximumf>, %11, %cst_6 [2] : vector<2x8x8xf32> to vector<2x8xf32>
    %13 = vector.shape_cast %12 : vector<2x8xf32> to vector<2x8x1xf32>
    %14 = vector.broadcast %13 : vector<2x8x1xf32> to vector<2x8x8xf32>
    %15 = arith.subf %11, %14 : vector<2x8x8xf32>
    %16 = math.exp %15 : vector<2x8x8xf32>
    %cst_7 = arith.constant dense<0.000000e+00> : vector<2x8xf32>
    %17 = vector.multi_reduction <add>, %16, %cst_7 [2] : vector<2x8x8xf32> to vector<2x8xf32>
    %18 = vector.shape_cast %17 : vector<2x8xf32> to vector<2x8x1xf32>
    %19 = vector.broadcast %18 : vector<2x8x1xf32> to vector<2x8x8xf32>
    %20 = arith.divf %16, %19 : vector<2x8x8xf32>
    %cst_8 = arith.constant dense<0.000000e+00> : vector<2x8x16xf32>
    %21 = tpu.matmul %20, %10, %cst_8 {dimension_numbers = #tpu.dot_dimension_numbers<[2], [1], [1], [2], [0, 0, 0, 1, 1, 2], [0], [0]>} : vector<2x8x8xf32>, vector<2x8x16xf32>, vector<2x8x16xf32> -> vector<2x8x16xf32>
    %c0_9 = arith.constant 0 : index
    %c0_10 = arith.constant 0 : index
    %c0_11 = arith.constant 0 : index
    %22 = vector.load %arg2[%c0_9, %c0_10, %c0_11] : memref<2x8x16xf32, #tpu.memory_space<vmem>>, vector<2x8x16xf32>
    tpu.vector_store %arg2[%c0_9, %c0_10, %c0_11], %21 {strides = array<i32>} : memref<2x8x16xf32, #tpu.memory_space<vmem>>, vector<2x8x16xf32>,
    return
  }
}

</mosaic_0001>

<llo_original>
// kernel: tpu_custom_call.1
$region0: #{tpu_custom_call.1}
  #allocation0 [shape = 'u32[]', space=smem, size = 0x4, offset = 0x4, fixed_abs, tag = 'smem constant byte address 0x4 - core index']
  #allocation1 [shape = 'u32[144,128]{1,0:T(1,128)}', space=vmem, size = 0x12000, scoped, tag = 'internal scratch']
  %s0 = inlined_call_operand.hbm [shape: f32[2,8,32], index: 0, kind: input, shape index: {}]
  %s1 = inlined_call_operand.hbm [shape: f32[33,48], index: 1, kind: input, shape index: {}]
  %s2 = inlined_call_operand.hbm [shape: f32[2,8,16], index: 2, kind: output, shape index: {}]
  %s3 = sld [smem:[#allocation0]]
  $region26: #{tpu_custom_call.1} parent=0
    _
  %s5 = ssub.s32 1, %s3
  %s6 = scalar_select 0, %s5, %s3
  $region1: #{tpu_custom_call.1} parent=0
    #allocation2 [shape = 'u8[8192]{0}', space=vmem, size = 0x2000, scoped, tag = 'input window, operand 0, single buffered']
    #allocation3 [shape = 's32[1]{0}', space=sflag, size = 0x4, scoped, tag = 'scoped memory for tpu_custom_call.1']
    #allocation4 [shape = 's32[1]{0}', space=sflag, size = 0x4, scoped, tag = 'scoped memory for tpu_custom_call.1']
    #allocation5 [shape = 'u8[20480]{0}', space=vmem, size = 0x5000, scoped, tag = 'input window, operand 1, single buffered']
    #allocation6 [shape = 's32[1]{0}', space=sflag, size = 0x4, scoped, tag = 'scoped memory for tpu_custom_call.1']
    #allocation7 [shape = 'u8[8192]{0}', space=vmem, size = 0x2000, scoped, tag = 'output window, operand 0, single buffered']
    %7 = vsyncpa [#allocation3], 0
    %8 = vsyncpa [#allocation6], 0
    %9 = vsyncpa [#allocation4], 0
    // Predicated region
    $region2: #{tpu_custom_call.1} parent=1 // pred_check
      _
    $region3: #{tpu_custom_call.1} parent=1 // pred_check_branch
      %11 = sbr.rel (0) target = $region5
    $region4: #{tpu_custom_call.1} parent=1 // pred_region
      %s13 = ssub.s32 256, 256
      %14 = vsyncadd [#allocation3], %s13
      %s15 = sshll.u32 [#allocation2], 4
      %s16 = int_to_ptr.vmem [resolvable:$true] %s15
      %21 = dma.hbm_to_vmem [thread:$0]  %s0, 256, %s16, [#allocation3], 128, 128, 8
    $region5: #{tpu_custom_call.1} parent=1 // pred_fallthru
      _
    // Predicated region
    $region6: #{tpu_custom_call.1} parent=1 // pred_check
      _
    $region7: #{tpu_custom_call.1} parent=1 // pred_check_branch
      %23 = sbr.rel (0) target = $region9
    $region8: #{tpu_custom_call.1} parent=1 // pred_region
      %s25 = ssub.s32 640, 640
      %26 = vsyncadd [#allocation6], %s25
      %s27 = sshll.u32 [#allocation5], 4
      %s28 = int_to_ptr.vmem [resolvable:$true] %s27
      %33 = dma.hbm_to_vmem [thread:$0]  %s1, 640, %s28, [#allocation6], 128, 128, 8
    $region9: #{tpu_custom_call.1} parent=1 // pred_fallthru
      _
    // Predicated region
    $region10: #{tpu_custom_call.1} parent=1 // pred_check
      _
    $region11: #{tpu_custom_call.1} parent=1 // pred_check_branch
      %35 = sbr.rel (0) target = $region13
    $region12: #{tpu_custom_call.1} parent=1 // pred_region
      %36 = dma.done [#allocation3], 256
    $region13: #{tpu_custom_call.1} parent=1 // pred_fallthru
      _
    // Predicated region
    $region14: #{tpu_custom_call.1} parent=1 // pred_check
      _
    $region15: #{tpu_custom_call.1} parent=1 // pred_check_branch
      %38 = sbr.rel (0) target = $region17
    $region16: #{tpu_custom_call.1} parent=1 // pred_region
      %39 = dma.done [#allocation6], 640
    $region17: #{tpu_custom_call.1} parent=1 // pred_fallthru
      _
    %v40 = vld [vmem:[#allocation5] sm:$0xff]
    %v41 = vld [vmem:[#allocation5 + $0x8] sm:$0xff]
    %v42 = vld [vmem:[#allocation5 + $0x10] sm:$0xff]
    %v43 = vld [vmem:[#allocation5 + $0x18] sm:$0xff]
    %v44 = vld [vmem:[#allocation5 + $0x20] sm:$0x1]
    %v45 = vld [vmem:[#allocation2] sm:$0xff]
    %v46 = vld [vmem:[#allocation2 + $0x8] sm:$0xff]
    %v47 = vlaneseq
    %v48 = vshrl.u32 %v47, 7
    %v49 = vsub.s32 0, %v48
    %v50 = vrot.slane %v44, %v49
    %vm51 = vcmask 261120
    %v53 = vsel %vm51, %v45, 0
    %v56 = vsel %vm51, %v46, 0
    %58 = vmatprep.subr.mxu0 0.0
    %59 = vmatpush1.msra.mxu0 0.0
    %60 = vmatprep.subr.mxu0 0.0
    %61 = vmatpush1.msra.mxu0 0.0
    %62 = vmatprep.subr.mxu0 0.0
    %63 = vmatpush1.msra.mxu0 0.0
    %64 = vmatprep.subr.mxu0 0.0
    %65 = vmatpush1.msra.mxu0 0.0
    %66 = vmatprep.subr.mxu0 0.0
    %67 = vmatpush1.msra.mxu0 0.0
    %68 = vmatprep.subr.mxu0 0.0
    %69 = vmatpush1.msra.mxu0 0.0
    %70 = vmatprep.subr.mxu0 0.0
    %71 = vmatpush1.msra.mxu0 0.0
    %72 = vmatprep.subr.mxu0 0.0
    %73 = vmatpush1.msra.mxu0 0.0
    %74 = vmatprep.subr.mxu0 0.0
    %75 = vmatpush1.msra.mxu0 0.0
    %76 = vmatprep.subr.mxu0 0.0
    %77 = vmatpush1.msra.mxu0 0.0
    %78 = vmatprep.subr.mxu0 0.0
    %79 = vmatpush1.msra.mxu0 0.0
    %80 = vmatprep.subr.mxu0 0.0
    %81 = vmatpush1.msra.mxu0 0.0
    %82 = vmatprep.subr.mxu0 0.0
    %83 = vmatpush1.msra.mxu0 %v43
    %84 = vmatprep.subr.mxu0 0.0
    %85 = vmatpush1.msra.mxu0 %v42
    %86 = vmatprep.subr.mxu0 0.0
    %87 = vmatpush1.msra.mxu0 %v41
    %88 = vmatprep.subr.mxu0 0.0
    %89 = vmatpush1.msra.mxu0 %v40
    %90 = vmatprep.subr.mxu0 0.0
    %91 = vmatpush2.msra.mxu0 0.0
    %92 = vmatprep.subr.mxu0 0.0
    %93 = vmatpush2.msra.mxu0 0.0
    %94 = vmatprep.subr.mxu0 0.0
    %95 = vmatpush2.msra.mxu0 0.0
    %96 = vmatprep.subr.mxu0 0.0
    %97 = vmatpush2.msra.mxu0 0.0
    %98 = vmatprep.subr.mxu0 0.0
    %99 = vmatpush2.msra.mxu0 0.0
    %100 = vmatprep.subr.mxu0 0.0
    %101 = vmatpush2.msra.mxu0 0.0
    %102 = vmatprep.subr.mxu0 0.0
    %103 = vmatpush2.msra.mxu0 0.0
    %104 = vmatprep.subr.mxu0 0.0
    %105 = vmatpush2.msra.mxu0 0.0
    %106 = vmatprep.subr.mxu0 0.0
    %107 = vmatpush2.msra.mxu0 0.0
    %108 = vmatprep.subr.mxu0 0.0
    %109 = vmatpush2.msra.mxu0 0.0
    %110 = vmatprep.subr.mxu0 0.0
    %111 = vmatpush2.msra.mxu0 0.0
    %112 = vmatprep.subr.mxu0 0.0
    %113 = vmatpush2.msra.mxu0 0.0
    %114 = vmatprep.subr.mxu0 0.0
    %115 = vmatpush2.msra.mxu0 0.0
    %116 = vmatprep.subr.mxu0 0.0
    %117 = vmatpush2.msra.mxu0 0.0
    %118 = vmatprep.subr.mxu0 0.0
    %119 = vmatpush2.msra.mxu0 0.0
    %120 = vmatprep.subr.mxu0 0.0
    %121 = vmatpush2.msra.mxu0 0.0
    %122 = vmatprep.mubr.f32.mxu0 0.0
    %123 = vmatmul.mubr.f32.gmra.mxu0 %v53
    %v124 = vpop.f32.mrf.mxu0
    %v125 = vadd.f32 %v50, %v124
    %v126 = vpop.f32.mrf.mxu0
    %127 = vmatprep.mubr.f32.mxu0 0.0
    %128 = vmatmul.mubr.f32.gmra.mxu0 %v56
    %v129 = vpop.f32.mrf.mxu0
    %v130 = vadd.f32 %v50, %v129
    %v131 = vpop.f32.mrf.mxu0
    %132 = vdwg.mxu0
    %134 = vrot.lane.b32.xlu0 %v125, 112
    %v135 = vpop.permute.xlu0 %134
    %vm136 = vcmask 130048
    %v137 = vsel %vm136, %v125, 0
    %v139 = vsel %vm136, %v135, 0
    %141 = vmatprep.subr.mxu0 0.0
    %142 = vmatpush1.xpose.msra.mxu0 0.0
    %143 = vmatprep.subr.mxu0 0.0
    %144 = vmatpush1.xpose.msra.mxu0 0.0
    %145 = vmatprep.subr.mxu0 0.0
    %146 = vmatpush1.xpose.msra.mxu0 0.0
    %147 = vmatprep.subr.mxu0 0.0
    %148 = vmatpush1.xpose.msra.mxu0 0.0
    %149 = vmatprep.subr.mxu0 0.0
    %150 = vmatpush1.xpose.msra.mxu0 0.0
    %151 = vmatprep.subr.mxu0 0.0
    %152 = vmatpush1.xpose.msra.mxu0 0.0
    %153 = vmatprep.subr.mxu0 0.0
    %154 = vmatpush1.xpose.msra.mxu0 0.0
    %155 = vmatprep.subr.mxu0 0.0
    %156 = vmatpush1.xpose.msra.mxu0 0.0
    %157 = vmatprep.subr.mxu0 0.0
    %158 = vmatpush1.xpose.msra.mxu0 0.0
    %159 = vmatprep.subr.mxu0 0.0
    %160 = vmatpush1.xpose.msra.mxu0 0.0
    %161 = vmatprep.subr.mxu0 0.0
    %162 = vmatpush1.xpose.msra.mxu0 0.0
    %163 = vmatprep.subr.mxu0 0.0
    %164 = vmatpush1.xpose.msra.mxu0 0.0
    %165 = vmatprep.subr.mxu0 0.0
    %166 = vmatpush1.xpose.msra.mxu0 0.0
    %167 = vmatprep.subr.mxu0 0.0
    %168 = vmatpush1.xpose.msra.mxu0 0.0
    %169 = vmatprep.subr.mxu0 0.0
    %170 = vmatpush1.xpose.msra.mxu0 0.0
    %171 = vmatprep.subr.mxu0 0.0
    %172 = vmatpush1.xpose.msra.mxu0 %v139
    %173 = vmatprep.subr.mxu0 0.0
    %174 = vmatpush2.xpose.msra.mxu0 0.0
    %175 = vmatprep.subr.mxu0 0.0
    %176 = vmatpush2.xpose.msra.mxu0 0.0
    %177 = vmatprep.subr.mxu0 0.0
    %178 = vmatpush2.xpose.msra.mxu0 0.0
    %179 = vmatprep.subr.mxu0 0.0
    %180 = vmatpush2.xpose.msra.mxu0 0.0
    %181 = vmatprep.subr.mxu0 0.0
    %182 = vmatpush2.xpose.msra.mxu0 0.0
    %183 = vmatprep.subr.mxu0 0.0
    %184 = vmatpush2.xpose.msra.mxu0 0.0
    %185 = vmatprep.subr.mxu0 0.0
    %186 = vmatpush2.xpose.msra.mxu0 0.0
    %187 = vmatprep.subr.mxu0 0.0
    %188 = vmatpush2.xpose.msra.mxu0 0.0
    %189 = vmatprep.subr.mxu0 0.0
    %190 = vmatpush2.xpose.msra.mxu0 0.0
    %191 = vmatprep.subr.mxu0 0.0
    %192 = vmatpush2.xpose.msra.mxu0 0.0
    %193 = vmatprep.subr.mxu0 0.0
    %194 = vmatpush2.xpose.msra.mxu0 0.0
    %195 = vmatprep.subr.mxu0 0.0
    %196 = vmatpush2.xpose.msra.mxu0 0.0
    %197 = vmatprep.subr.mxu0 0.0
    %198 = vmatpush2.xpose.msra.mxu0 0.0
    %199 = vmatprep.subr.mxu0 0.0
    %200 = vmatpush2.xpose.msra.mxu0 0.0
    %201 = vmatprep.subr.mxu0 0.0
    %202 = vmatpush2.xpose.msra.mxu0 0.0
    %203 = vmatprep.subr.mxu0 0.0
    %204 = vmatpush2.xpose.msra.mxu0 0.0
    %205 = vmatprep.mubr.f32.mxu0 0.0
    %206 = vmatmul.mubr.f32.gmra.mxu0 %v137
    %v207 = vpop.f32.mrf.mxu0
    %v208 = vadd.f32 0.0, %v207
    %v209 = vpop.f32.mrf.mxu0
    %210 = vdwg.mxu0
    %212 = vrot.lane.b32.xlu0 %v130, 112
    %v213 = vpop.permute.xlu0 %212
    %v214 = vsel %vm136, %v130, 0
    %v216 = vsel %vm136, %v213, 0
    %218 = vmatprep.subr.mxu0 0.0
    %219 = vmatpush1.xpose.msra.mxu0 0.0
    %220 = vmatprep.subr.mxu0 0.0
    %221 = vmatpush1.xpose.msra.mxu0 0.0
    %222 = vmatprep.subr.mxu0 0.0
    %223 = vmatpush1.xpose.msra.mxu0 0.0
    %224 = vmatprep.subr.mxu0 0.0
    %225 = vmatpush1.xpose.msra.mxu0 0.0
    %226 = vmatprep.subr.mxu0 0.0
    %227 = vmatpush1.xpose.msra.mxu0 0.0
    %228 = vmatprep.subr.mxu0 0.0
    %229 = vmatpush1.xpose.msra.mxu0 0.0
    %230 = vmatprep.subr.mxu0 0.0
    %231 = vmatpush1.xpose.msra.mxu0 0.0
    %232 = vmatprep.subr.mxu0 0.0
    %233 = vmatpush1.xpose.msra.mxu0 0.0
    %234 = vmatprep.subr.mxu0 0.0
    %235 = vmatpush1.xpose.msra.mxu0 0.0
    %236 = vmatprep.subr.mxu0 0.0
    %237 = vmatpush1.xpose.msra.mxu0 0.0
    %238 = vmatprep.subr.mxu0 0.0
    %239 = vmatpush1.xpose.msra.mxu0 0.0
    %240 = vmatprep.subr.mxu0 0.0
    %241 = vmatpush1.xpose.msra.mxu0 0.0
    %242 = vmatprep.subr.mxu0 0.0
    %243 = vmatpush1.xpose.msra.mxu0 0.0
    %244 = vmatprep.subr.mxu0 0.0
    %245 = vmatpush1.xpose.msra.mxu0 0.0
    %246 = vmatprep.subr.mxu0 0.0
    %247 = vmatpush1.xpose.msra.mxu0 0.0
    %248 = vmatprep.subr.mxu0 0.0
    %249 = vmatpush1.xpose.msra.mxu0 %v216
    %250 = vmatprep.subr.mxu0 0.0
    %251 = vmatpush2.xpose.msra.mxu0 0.0
    %252 = vmatprep.subr.mxu0 0.0
    %253 = vmatpush2.xpose.msra.mxu0 0.0
    %254 = vmatprep.subr.mxu0 0.0
    %255 = vmatpush2.xpose.msra.mxu0 0.0
    %256 = vmatprep.subr.mxu0 0.0
    %257 = vmatpush2.xpose.msra.mxu0 0.0
    %258 = vmatprep.subr.mxu0 0.0
    %259 = vmatpush2.xpose.msra.mxu0 0.0
    %260 = vmatprep.subr.mxu0 0.0
    %261 = vmatpush2.xpose.msra.mxu0 0.0
    %262 = vmatprep.subr.mxu0 0.0
    %263 = vmatpush2.xpose.msra.mxu0 0.0
    %264 = vmatprep.subr.mxu0 0.0
    %265 = vmatpush2.xpose.msra.mxu0 0.0
    %266 = vmatprep.subr.mxu0 0.0
    %267 = vmatpush2.xpose.msra.mxu0 0.0
    %268 = vmatprep.subr.mxu0 0.0
    %269 = vmatpush2.xpose.msra.mxu0 0.0
    %270 = vmatprep.subr.mxu0 0.0
    %271 = vmatpush2.xpose.msra.mxu0 0.0
    %272 = vmatprep.subr.mxu0 0.0
    %273 = vmatpush2.xpose.msra.mxu0 0.0
    %274 = vmatprep.subr.mxu0 0.0
    %275 = vmatpush2.xpose.msra.mxu0 0.0
    %276 = vmatprep.subr.mxu0 0.0
    %277 = vmatpush2.xpose.msra.mxu0 0.0
    %278 = vmatprep.subr.mxu0 0.0
    %279 = vmatpush2.xpose.msra.mxu0 0.0
    %280 = vmatprep.subr.mxu0 0.0
    %281 = vmatpush2.xpose.msra.mxu0 0.0
    %282 = vmatprep.mubr.f32.mxu0 0.0
    %283 = vmatmul.mubr.f32.gmra.mxu0 %v214
    %v284 = vpop.f32.mrf.mxu0
    %v285 = vadd.f32 0.0, %v284
    %v286 = vpop.f32.mrf.mxu0
    %287 = vdwg.mxu0
    %vm288 = vcmask 64512
    %v289 = vsel %vm288, %v208, -inf
    %290 = vmax.xlane.f32.xlu0 %v289
    %v291 = vpop.xlane.xlu0 %290
    %v292 = vsel %vm288, %v285, -inf
    %293 = vmax.xlane.f32.xlu0 %v292
    %v294 = vpop.xlane.xlu0 %293
    %v295 = vsub.f32 %v208, %v291
    %v296 = vsub.f32 %v285, %v294
    %v297 = vmul.f32 %v295, 1.442695
    %v298 = vpow.pop %v297
    %v299 = vmul.f32 %v296, 1.442695
    %v300 = vpow.pop %v299
    %v301 = vsel %vm288, %v298, 0.0
    %302 = vadd.xlane.f32.xlu0 %v301
    %v303 = vpop.xlane.xlu0 %302
    %v304 = vsel %vm288, %v300, 0.0
    %305 = vadd.xlane.f32.xlu0 %v304
    %v306 = vpop.xlane.xlu0 %305
    %v307 = vrcp.pop %v303
    %v308 = vmul.f32 %v298, %v307
    %v309 = vrcp.pop %v306
    %v310 = vmul.f32 %v300, %v309
    %311 = vrot.lane.b32.xlu0 %v125, 96
    %v312 = vpop.permute.xlu0 %311
    %v315 = vsel %vm288, %v308, 0
    %317 = vmatprep.subr.mxu0 0.0
    %318 = vmatpush1.msra.mxu0 0.0
    %319 = vmatprep.subr.mxu0 0.0
    %320 = vmatpush1.msra.mxu0 0.0
    %321 = vmatprep.subr.mxu0 0.0
    %322 = vmatpush1.msra.mxu0 0.0
    %323 = vmatprep.subr.mxu0 0.0
    %324 = vmatpush1.msra.mxu0 0.0
    %325 = vmatprep.subr.mxu0 0.0
    %326 = vmatpush1.msra.mxu0 0.0
    %327 = vmatprep.subr.mxu0 0.0
    %328 = vmatpush1.msra.mxu0 0.0
    %329 = vmatprep.subr.mxu0 0.0
    %330 = vmatpush1.msra.mxu0 0.0
    %331 = vmatprep.subr.mxu0 0.0
    %332 = vmatpush1.msra.mxu0 0.0
    %333 = vmatprep.subr.mxu0 0.0
    %334 = vmatpush1.msra.mxu0 0.0
    %335 = vmatprep.subr.mxu0 0.0
    %336 = vmatpush1.msra.mxu0 0.0
    %337 = vmatprep.subr.mxu0 0.0
    %338 = vmatpush1.msra.mxu0 0.0
    %339 = vmatprep.subr.mxu0 0.0
    %340 = vmatpush1.msra.mxu0 0.0
    %341 = vmatprep.subr.mxu0 0.0
    %342 = vmatpush1.msra.mxu0 0.0
    %343 = vmatprep.subr.mxu0 0.0
    %344 = vmatpush1.msra.mxu0 0.0
    %345 = vmatprep.subr.mxu0 0.0
    %346 = vmatpush1.msra.mxu0 0.0
    %347 = vmatprep.subr.mxu0 0.0
    %348 = vmatpush1.msra.mxu0 %v312
    %349 = vmatprep.subr.mxu0 0.0
    %350 = vmatpush2.msra.mxu0 0.0
    %351 = vmatprep.subr.mxu0 0.0
    %352 = vmatpush2.msra.mxu0 0.0
    %353 = vmatprep.subr.mxu0 0.0
    %354 = vmatpush2.msra.mxu0 0.0
    %355 = vmatprep.subr.mxu0 0.0
    %356 = vmatpush2.msra.mxu0 0.0
    %357 = vmatprep.subr.mxu0 0.0
    %358 = vmatpush2.msra.mxu0 0.0
    %359 = vmatprep.subr.mxu0 0.0
    %360 = vmatpush2.msra.mxu0 0.0
    %361 = vmatprep.subr.mxu0 0.0
    %362 = vmatpush2.msra.mxu0 0.0
    %363 = vmatprep.subr.mxu0 0.0
    %364 = vmatpush2.msra.mxu0 0.0
    %365 = vmatprep.subr.mxu0 0.0
    %366 = vmatpush2.msra.mxu0 0.0
    %367 = vmatprep.subr.mxu0 0.0
    %368 = vmatpush2.msra.mxu0 0.0
    %369 = vmatprep.subr.mxu0 0.0
    %370 = vmatpush2.msra.mxu0 0.0
    %371 = vmatprep.subr.mxu0 0.0
    %372 = vmatpush2.msra.mxu0 0.0
    %373 = vmatprep.subr.mxu0 0.0
    %374 = vmatpush2.msra.mxu0 0.0
    %375 = vmatprep.subr.mxu0 0.0
    %376 = vmatpush2.msra.mxu0 0.0
    %377 = vmatprep.subr.mxu0 0.0
    %378 = vmatpush2.msra.mxu0 0.0
    %379 = vmatprep.subr.mxu0 0.0
    %380 = vmatpush2.msra.mxu0 0.0
    %381 = vmatprep.mubr.f32.mxu0 0.0
    %382 = vmatmul.mubr.f32.gmra.mxu0 %v315
    %v383 = vpop.f32.mrf.mxu0
    %v384 = vadd.f32 0.0, %v383
    %v385 = vpop.f32.mrf.mxu0
    %386 = vdwg.mxu0
    %387 = vrot.lane.b32.xlu0 %v130, 96
    %v388 = vpop.permute.xlu0 %387
    %v391 = vsel %vm288, %v310, 0
    %393 = vmatprep.subr.mxu0 0.0
    %394 = vmatpush1.msra.mxu0 0.0
    %395 = vmatprep.subr.mxu0 0.0
    %396 = vmatpush1.msra.mxu0 0.0
    %397 = vmatprep.subr.mxu0 0.0
    %398 = vmatpush1.msra.mxu0 0.0
    %399 = vmatprep.subr.mxu0 0.0
    %400 = vmatpush1.msra.mxu0 0.0
    %401 = vmatprep.subr.mxu0 0.0
    %402 = vmatpush1.msra.mxu0 0.0
    %403 = vmatprep.subr.mxu0 0.0
    %404 = vmatpush1.msra.mxu0 0.0
    %405 = vmatprep.subr.mxu0 0.0
    %406 = vmatpush1.msra.mxu0 0.0
    %407 = vmatprep.subr.mxu0 0.0
    %408 = vmatpush1.msra.mxu0 0.0
    %409 = vmatprep.subr.mxu0 0.0
    %410 = vmatpush1.msra.mxu0 0.0
    %411 = vmatprep.subr.mxu0 0.0
    %412 = vmatpush1.msra.mxu0 0.0
    %413 = vmatprep.subr.mxu0 0.0
    %414 = vmatpush1.msra.mxu0 0.0
    %415 = vmatprep.subr.mxu0 0.0
    %416 = vmatpush1.msra.mxu0 0.0
    %417 = vmatprep.subr.mxu0 0.0
    %418 = vmatpush1.msra.mxu0 0.0
    %419 = vmatprep.subr.mxu0 0.0
    %420 = vmatpush1.msra.mxu0 0.0
    %421 = vmatprep.subr.mxu0 0.0
    %422 = vmatpush1.msra.mxu0 0.0
    %423 = vmatprep.subr.mxu0 0.0
    %424 = vmatpush1.msra.mxu0 %v388
    %425 = vmatprep.subr.mxu0 0.0
    %426 = vmatpush2.msra.mxu0 0.0
    %427 = vmatprep.subr.mxu0 0.0
    %428 = vmatpush2.msra.mxu0 0.0
    %429 = vmatprep.subr.mxu0 0.0
    %430 = vmatpush2.msra.mxu0 0.0
    %431 = vmatprep.subr.mxu0 0.0
    %432 = vmatpush2.msra.mxu0 0.0
    %433 = vmatprep.subr.mxu0 0.0
    %434 = vmatpush2.msra.mxu0 0.0
    %435 = vmatprep.subr.mxu0 0.0
    %436 = vmatpush2.msra.mxu0 0.0
    %437 = vmatprep.subr.mxu0 0.0
    %438 = vmatpush2.msra.mxu0 0.0
    %439 = vmatprep.subr.mxu0 0.0
    %440 = vmatpush2.msra.mxu0 0.0
    %441 = vmatprep.subr.mxu0 0.0
    %442 = vmatpush2.msra.mxu0 0.0
    %443 = vmatprep.subr.mxu0 0.0
    %444 = vmatpush2.msra.mxu0 0.0
    %445 = vmatprep.subr.mxu0 0.0
    %446 = vmatpush2.msra.mxu0 0.0
    %447 = vmatprep.subr.mxu0 0.0
    %448 = vmatpush2.msra.mxu0 0.0
    %449 = vmatprep.subr.mxu0 0.0
    %450 = vmatpush2.msra.mxu0 0.0
    %451 = vmatprep.subr.mxu0 0.0
    %452 = vmatpush2.msra.mxu0 0.0
    %453 = vmatprep.subr.mxu0 0.0
    %454 = vmatpush2.msra.mxu0 0.0
    %455 = vmatprep.subr.mxu0 0.0
    %456 = vmatpush2.msra.mxu0 0.0
    %457 = vmatprep.mubr.f32.mxu0 0.0
    %458 = vmatmul.mubr.f32.gmra.mxu0 %v391
    %v459 = vpop.f32.mrf.mxu0
    %v460 = vadd.f32 0.0, %v459
    %v461 = vpop.f32.mrf.mxu0
    %462 = vdwg.mxu0
    %463 = vst.msk [vmem:[#allocation7] sm:$0xff] %vm136, %v384
    %464 = vst.msk [vmem:[#allocation7 + $0x8] sm:$0xff] %vm136, %v460
    // Predicated region
    $region18: #{tpu_custom_call.1} parent=1 // pred_check
      _
    $region19: #{tpu_custom_call.1} parent=1 // pred_check_branch
      %466 = sbr.rel (0) target = $region21
    $region20: #{tpu_custom_call.1} parent=1 // pred_region
      %s468 = ssub.s32 256, 256
      %469 = vsyncadd [#allocation4], %s468
      %s470 = sshll.u32 [#allocation7], 4
      %s471 = int_to_ptr.vmem [resolvable:$true] %s470
      %476 = dma.vmem_to_hbm [thread:$0]  %s471, 256, %s2, [#allocation4], 128, 128, 8
    $region21: #{tpu_custom_call.1} parent=1 // pred_fallthru
      _
    // Predicated region
    $region22: #{tpu_custom_call.1} parent=1 // pred_check
      _
    $region23: #{tpu_custom_call.1} parent=1 // pred_check_branch
      %478 = sbr.rel (0) target = $region25
    $region24: #{tpu_custom_call.1} parent=1 // pred_region
      %479 = dma.done [#allocation4], 256
    $region25: #{tpu_custom_call.1} parent=1 // pred_fallthru
      _
    %480 = vsyncpa [#allocation3], 1
    %481 = vsyncpa [#allocation6], 1
    %482 = vsyncpa [#allocation4], 1

</llo_original>
